<compile_context>
chip_gen: v7x
topology: tpu7x:2x2x1
jax: 0.10.0
libtpu: 0.0.40
codegen_flags: <defaults>
</compile_context>

<pallas_src>
import functools

import jax
import jax.numpy as jnp
from jax.experimental import pallas as pl
from jax.experimental.pallas import tpu as pltpu

LANE = 128


def _round_up(n, m):
    return (n + m - 1) // m * m


def _qnet_kernel(x_ref, w1_ref, b1_ref, w2_ref, b2_ref, o_ref):
    # Cast x to bf16 inside the kernel (VPU cast rides free under DMA/MXU slack).
    x = x_ref[...].astype(jnp.bfloat16)
    # hidden = relu(x @ W1 + b1): bf16 MXU inputs, f32 accumulation + f32 epilogue
    # (f32 bias/ReLU is the native VPU path on v5e as well).
    h = jnp.dot(x, w1_ref[...], preferred_element_type=jnp.float32)
    h = jnp.maximum(h + b1_ref[...], 0.0)
    # out = h @ W2 + b2: recast h to bf16 for the MXU, accumulate in f32,
    # store bf16 to halve the padded-output HBM writeback.
    o = jnp.dot(h.astype(w2_ref.dtype), w2_ref[...],
                preferred_element_type=jnp.float32)
    o_ref[...] = (o + b2_ref[...]).astype(o_ref.dtype)


def prepare_params(w1, b1, w2, b2):
    """One-time parameter prep (hoisted out of the forward path).

    PyTorch nn.Linear stores W as (out, in); we pre-transpose to (in, out),
    zero-pad hidden/output lane dims to multiples of 128 (exact-zero padding
    lanes), cast weights to bf16 (biases stay f32 for the VPU epilogue).
    """
    hidden, in_size = w1.shape
    out_size = w2.shape[0]
    h_pad = _round_up(hidden, LANE)
    o_pad = _round_up(out_size, LANE)

    w1_t = jnp.zeros((in_size, h_pad), jnp.bfloat16)
    w1_t = w1_t.at[:, :hidden].set(w1.T.astype(jnp.bfloat16))
    b1_r = jnp.zeros((1, h_pad), jnp.float32)
    b1_r = b1_r.at[:, :hidden].set(b1.reshape(1, -1).astype(jnp.float32))
    w2_t = jnp.zeros((h_pad, o_pad), jnp.bfloat16)
    w2_t = w2_t.at[:hidden, :out_size].set(w2.T.astype(jnp.bfloat16))
    b2_r = jnp.zeros((1, o_pad), jnp.float32)
    b2_r = b2_r.at[:, :out_size].set(b2.reshape(1, -1).astype(jnp.float32))
    return w1_t, b1_r, w2_t, b2_r


@functools.partial(jax.jit, static_argnames=("out_size", "block_batch"))
def _pallas_forward(x, w1_t, b1_r, w2_t, b2_r, *, out_size, block_batch=4096):
    """x: (B, in) f32. Prepped params from `prepare_params`. Returns (B, out) f32."""
    B, in_size = x.shape
    h_pad = w1_t.shape[1]
    o_pad = w2_t.shape[1]

    # Batch tile: always a multiple of 8 sublanes, capped at block_batch.
    tb = min(block_batch, _round_up(B, 8))
    tb = max(8, (tb // 8) * 8)
    # v7x megacore: when B is big enough, force >= 2 grid steps so both
    # TensorCores get work, while keeping each step >= 512 rows.
    if B >= 1024:
        tb = min(tb, max(512, _round_up(pl.cdiv(B, 2), 8)))

    grid = (pl.cdiv(B, tb),)

    flops = 2 * B * in_size * h_pad + 2 * B * h_pad * o_pad
    bytes_accessed = (B * in_size * 4            # x read (f32)
                      + w1_t.size * 2 + w2_t.size * 2
                      + b1_r.size * 4 + b2_r.size * 4
                      + B * o_pad * 2)           # bf16 output writeback

    out = pl.pallas_call(
        _qnet_kernel,
        out_shape=jax.ShapeDtypeStruct((B, o_pad), jnp.bfloat16),
        grid=grid,
        in_specs=[
            pl.BlockSpec((tb, in_size), lambda i: (i, 0)),     # x: batch-tiled (ragged edge masked)
            pl.BlockSpec((in_size, h_pad), lambda i: (0, 0)),  # W1: VMEM-resident
            pl.BlockSpec((1, h_pad), lambda i: (0, 0)),        # b1: resident
            pl.BlockSpec((h_pad, o_pad), lambda i: (0, 0)),    # W2: resident
            pl.BlockSpec((1, o_pad), lambda i: (0, 0)),        # b2: resident
        ],
        out_specs=pl.BlockSpec((tb, o_pad), lambda i: (i, 0)),
        compiler_params=pltpu.CompilerParams(
            dimension_semantics=("parallel",),
            vmem_limit_bytes=32 * 1024 * 1024,
        ),
        cost_estimate=pl.CostEstimate(
            flops=flops, transcendentals=0, bytes_accessed=bytes_accessed),
    )(x, w1_t, b1_r, w2_t, b2_r)

    # Tiny slice of the padded bf16 slab; cast back to f32 for downstream
    # Q-value consumers (argmax / TD targets stay in full precision).
    return out[:, :out_size].astype(jnp.float32)


@functools.partial(jax.jit, static_argnames=("out_size",))
def _xla_forward(x, w1_t, b1_r, w2_t, b2_r, *, out_size):
    """Plain-XLA fallback for small batches (avoids pallas_call launch cost)."""
    h = jnp.maximum(
        jnp.dot(x.astype(jnp.bfloat16), w1_t, preferred_element_type=jnp.float32)
        + b1_r, 0.0)
    o = jnp.dot(h.astype(jnp.bfloat16), w2_t,
                preferred_element_type=jnp.float32) + b2_r
    return o[:, :out_size]


def linear_qnet_forward(x, w1_t, b1_r, w2_t, b2_r, *, out_size,
                        block_batch=4096, min_pallas_batch=512):
    """Dispatcher: Pallas for replay-buffer-sized batches, XLA for tiny ones."""
    if x.shape[0] < min_pallas_batch:
        return _xla_forward(x, w1_t, b1_r, w2_t, b2_r, out_size=out_size)
    return _pallas_forward(x, w1_t, b1_r, w2_t, b2_r,
                           out_size=out_size, block_batch=block_batch)


def init_params(key, input_size, hidden_size, output_size):
    """Deterministic init matching nn.Linear's uniform(-1/sqrt(fan_in), 1/sqrt(fan_in))."""
    k1, k2, k3, k4 = jax.random.split(key, 4)
    lim1 = 1.0 / jnp.sqrt(input_size)
    lim2 = 1.0 / jnp.sqrt(hidden_size)
    w1 = jax.random.uniform(k1, (hidden_size, input_size), jnp.float32, -lim1, lim1)
    b1 = jax.random.uniform(k2, (hidden_size,), jnp.float32, -lim1, lim1)
    w2 = jax.random.uniform(k3, (output_size, hidden_size), jnp.float32, -lim2, lim2)
    b2 = jax.random.uniform(k4, (output_size,), jnp.float32, -lim2, lim2)
    return w1, b1, w2, b2


if __name__ == "__main__":
    # Snake-game DQN shapes: 11 state features, 32 hidden, 3 actions.
    batch, input_size, hidden_size, output_size = 8, 11, 32, 3

    key = jax.random.PRNGKey(0)
    kx, kp = jax.random.split(key)
    x = jax.random.normal(kx, (batch, input_size), jnp.float32)
    w1, b1, w2, b2 = init_params(kp, input_size, hidden_size, output_size)

    # One-time param prep (transpose / pad / cast), kept off the forward path.
    w1_t, b1_r, w2_t, b2_r = prepare_params(w1, b1, w2, b2)

    # Pure-JAX f32 reference of the same semantics (bf16 MXU/store => loose tol).
    def ref_fn(xv):
        return jnp.maximum(xv @ w1.T + b1, 0.0) @ w2.T + b2

    # 1) Small batch, forced through the Pallas kernel (single grid step).
    out = linear_qnet_forward(x, w1_t, b1_r, w2_t, b2_r,
                              out_size=output_size, min_pallas_batch=0)
    out = jax.block_until_ready(out)
    assert out.shape == (batch, output_size)
    assert jnp.allclose(out, ref_fn(x), atol=5e-2, rtol=5e-2)

    # 2) Replay-buffer-sized batch: exercises the batch grid and the ragged
    #    last block (300 rows, tile 128 => 3 grid steps, masked edge stores).
    big_b = 300
    xb = jax.random.normal(jax.random.PRNGKey(1), (big_b, input_size), jnp.float32)
    out_b = linear_qnet_forward(xb, w1_t, b1_r, w2_t, b2_r,
                                out_size=output_size, block_batch=128,
                                min_pallas_batch=0)
    out_b = jax.block_until_ready(out_b)
    assert out_b.shape == (big_b, output_size)
    assert jnp.allclose(out_b, ref_fn(xb), atol=5e-2, rtol=5e-2)

    # 3) Default dispatcher path for tiny inference batches (plain-XLA fallback).
    out_s = jax.block_until_ready(
        linear_qnet_forward(x, w1_t, b1_r, w2_t, b2_r, out_size=output_size))
    assert out_s.shape == (batch, output_size)
    assert jnp.allclose(out_s, ref_fn(x), atol=5e-2, rtol=5e-2)

    # TODO(synk): LinearQNet.save() (torch.save of the state_dict) is file I/O,
    # not a forward-pass op; intentionally not translated.
    print("KERNEL_OK")
</pallas_src>

<mosaic_0001>
module attributes {stable_mosaic.version = 11 : i64} {
  func.func @_qnet_kernel(%arg0: i32, %arg1: memref<8x11xf32, #tpu.memory_space<vmem>>, %arg2: memref<11x128xbf16, #tpu.memory_space<vmem>>, %arg3: memref<1x128xf32, #tpu.memory_space<vmem>>, %arg4: memref<128x128xbf16, #tpu.memory_space<vmem>>, %arg5: memref<1x128xf32, #tpu.memory_space<vmem>>, %arg6: memref<8x128xbf16, #tpu.memory_space<vmem>>) attributes {dimension_semantics = [#tpu.dimension_semantics<parallel>], iteration_bounds = array<i64: 1>, scalar_prefetch = 0 : i64, scratch_operands = 0 : i64, tpu.core_type = #tpu.core_type<tc>, window_params = [{transform_indices = @transform_0, window_bounds = array<i64: 8, 11>}, {pipeline_mode = #tpu.pipeline_mode<synchronous>, transform_indices = @transform_1, window_bounds = array<i64: 11, 128>}, {pipeline_mode = #tpu.pipeline_mode<synchronous>, transform_indices = @transform_2, window_bounds = array<i64: 1, 128>}, {pipeline_mode = #tpu.pipeline_mode<synchronous>, transform_indices = @transform_3, window_bounds = array<i64: 128, 128>}, {pipeline_mode = #tpu.pipeline_mode<synchronous>, transform_indices = @transform_4, window_bounds = array<i64: 1, 128>}, {transform_indices = @transform_5, window_bounds = array<i64: 8, 128>}]} {
    %c0 = arith.constant 0 : index
    %c0_0 = arith.constant 0 : index
    %0 = vector.load %arg1[%c0, %c0_0] : memref<8x11xf32, #tpu.memory_space<vmem>>, vector<8x11xf32>
    %1 = arith.truncf %0 : vector<8x11xf32> to vector<8x11xbf16>
    %c0_1 = arith.constant 0 : index
    %c0_2 = arith.constant 0 : index
    %2 = vector.load %arg2[%c0_1, %c0_2] : memref<11x128xbf16, #tpu.memory_space<vmem>>, vector<11x128xbf16>
    %cst = arith.constant dense<0.000000e+00> : vector<8x128xf32>
    %3 = tpu.matmul %1, %2, %cst {dimension_numbers = #tpu.dot_dimension_numbers<[1], [0], [0], [1], [0, 0, 1, 1], [], []>} : vector<8x11xbf16>, vector<11x128xbf16>, vector<8x128xf32> -> vector<8x128xf32>
    %c0_3 = arith.constant 0 : index
    %c0_4 = arith.constant 0 : index
    %4 = vector.load %arg3[%c0_3, %c0_4] : memref<1x128xf32, #tpu.memory_space<vmem>>, vector<1x128xf32>
    %5 = vector.broadcast %4 : vector<1x128xf32> to vector<8x128xf32>
    %6 = arith.addf %3, %5 : vector<8x128xf32>
    %cst_5 = arith.constant 0.000000e+00 : f32
    %7 = vector.broadcast %cst_5 : f32 to vector<8x128xf32>
    %8 = arith.maximumf %6, %7 : vector<8x128xf32>
    %9 = arith.truncf %8 : vector<8x128xf32> to vector<8x128xbf16>
    %c0_6 = arith.constant 0 : index
    %c0_7 = arith.constant 0 : index
    %10 = vector.load %arg4[%c0_6, %c0_7] : memref<128x128xbf16, #tpu.memory_space<vmem>>, vector<128x128xbf16>
    %cst_8 = arith.constant dense<0.000000e+00> : vector<8x128xf32>
    %11 = tpu.matmul %9, %10, %cst_8 {dimension_numbers = #tpu.dot_dimension_numbers<[1], [0], [0], [1], [0, 0, 1, 1], [], []>} : vector<8x128xbf16>, vector<128x128xbf16>, vector<8x128xf32> -> vector<8x128xf32>
    %c0_9 = arith.constant 0 : index
    %c0_10 = arith.constant 0 : index
    %12 = vector.load %arg5[%c0_9, %c0_10] : memref<1x128xf32, #tpu.memory_space<vmem>>, vector<1x128xf32>
    %13 = vector.broadcast %12 : vector<1x128xf32> to vector<8x128xf32>
    %14 = arith.addf %11, %13 : vector<8x128xf32>
    %15 = arith.truncf %14 : vector<8x128xf32> to vector<8x128xbf16>
    %c0_11 = arith.constant 0 : index
    %c0_12 = arith.constant 0 : index
    %16 = vector.load %arg6[%c0_11, %c0_12] : memref<8x128xbf16, #tpu.memory_space<vmem>>, vector<8x128xbf16>
    tpu.vector_store %arg6[%c0_11, %c0_12], %15 {strides = array<i32>} : memref<8x128xbf16, #tpu.memory_space<vmem>>, vector<8x128xbf16>,
    return
  }
  func.func @transform_0(%arg0: i32) -> (i32, i32) {
    %c0_i32 = arith.constant 0 : i32
    %c0_i32_0 = arith.constant 0 : i32
    return %arg0, %c0_i32 : i32, i32
  }
  func.func @transform_1(%arg0: i32) -> (i32, i32) {
    %c0_i32 = arith.constant 0 : i32
    %c0_i32_0 = arith.constant 0 : i32
    %c0_i32_1 = arith.constant 0 : i32
    return %c0_i32, %c0_i32_0 : i32, i32
  }
  func.func @transform_2(%arg0: i32) -> (i32, i32) {
    %c0_i32 = arith.constant 0 : i32
    %c0_i32_0 = arith.constant 0 : i32
    %c0_i32_1 = arith.constant 0 : i32
    return %c0_i32, %c0_i32_0 : i32, i32
  }
  func.func @transform_3(%arg0: i32) -> (i32, i32) {
    %c0_i32 = arith.constant 0 : i32
    %c0_i32_0 = arith.constant 0 : i32
    %c0_i32_1 = arith.constant 0 : i32
    return %c0_i32, %c0_i32_0 : i32, i32
  }
  func.func @transform_4(%arg0: i32) -> (i32, i32) {
    %c0_i32 = arith.constant 0 : i32
    %c0_i32_0 = arith.constant 0 : i32
    %c0_i32_1 = arith.constant 0 : i32
    return %c0_i32, %c0_i32_0 : i32, i32
  }
  func.func @transform_5(%arg0: i32) -> (i32, i32) {
    %c0_i32 = arith.constant 0 : i32
    %c0_i32_0 = arith.constant 0 : i32
    return %arg0, %c0_i32 : i32, i32
  }
}

</mosaic_0001>

<llo_original>
// kernel: _pallas_forward.1
$region0: #{_pallas_forward.1}
  #allocation0 [shape = 'u32[]', space=smem, size = 0x4, offset = 0x4, fixed_abs, tag = 'smem constant byte address 0x4 - core index']
  #allocation1 [shape = 'u32[144,128]{1,0:T(1,128)}', space=vmem, size = 0x12000, scoped, tag = 'internal scratch']
  %s0 = inlined_call_operand.hbm [shape: f32[8,11], index: 0, kind: input, shape index: {}]
  %s1 = inlined_call_operand.hbm [shape: bf16[11,128], index: 1, kind: input, shape index: {}]
  %s2 = inlined_call_operand.vmem [shape: f32[1,128], index: 2, kind: input, shape index: {}]
  %s3 = inlined_call_operand.hbm [shape: bf16[128,128], index: 3, kind: input, shape index: {}]
  %s4 = inlined_call_operand.vmem [shape: f32[1,128], index: 4, kind: input, shape index: {}]
  %s5 = inlined_call_operand.vmem [shape: bf16[8,128], index: 5, kind: output, shape index: {}]
  %s6 = sld [smem:[#allocation0]]
  $region42: #{_pallas_forward.1} parent=0
    _
  %s8 = ssub.s32 1, %s6
  %s9 = scalar_select 0, %s8, %s6
  $region1: #{_pallas_forward.1} parent=0
    #allocation2 [shape = 'u8[4096]{0}', space=vmem, size = 0x1000, scoped, tag = 'input window, operand 0, single buffered']
    #allocation3 [shape = 's32[1]{0}', space=sflag, size = 0x4, scoped, tag = 'scoped memory for _pallas_forward.1']
    #allocation4 [shape = 'u8[4096]{0}', space=vmem, size = 0x1000, scoped, tag = 'input window, operand 1, single buffered']
    #allocation5 [shape = 's32[1]{0}', space=sflag, size = 0x4, scoped, tag = 'scoped memory for _pallas_forward.1']
    #allocation6 [shape = 'u8[32768]{0}', space=vmem, size = 0x8000, scoped, tag = 'input window, operand 3, single buffered']
    %10 = vsyncpa [#allocation3], 0
    %11 = vsyncpa [#allocation5], 0
    // Predicated region
    $region2: #{_pallas_forward.1} parent=1 // pred_check
      _
    $region3: #{_pallas_forward.1} parent=1 // pred_check_branch
      %13 = sbr.rel (0) target = $region5
    $region4: #{_pallas_forward.1} parent=1 // pred_region
      %s15 = ssub.s32 128, 128
      %16 = vsyncadd [#allocation3], %s15
      %s18 = sshll.u32 [#allocation2], 4
      %s19 = int_to_ptr.vmem [resolvable:$true] %s18
      %21 = dma.hbm_to_vmem [thread:$0]  %s0, 128, %s19, [#allocation3]
    $region5: #{_pallas_forward.1} parent=1 // pred_fallthru
      _
    // Predicated region
    $region6: #{_pallas_forward.1} parent=1 // pred_check
      _
    $region7: #{_pallas_forward.1} parent=1 // pred_check_branch
      %23 = sbr.rel (0) target = $region9
    $region8: #{_pallas_forward.1} parent=1 // pred_region
      %s25 = ssub.s32 128, 128
      %26 = vsyncadd [#allocation5], %s25
      %s27 = sshll.u32 [#allocation4], 4
      %s28 = int_to_ptr.vmem [resolvable:$true] %s27
      %33 = dma.hbm_to_vmem [thread:$0]  %s1, 128, %s28, [#allocation5], 64, 64, 4
    $region9: #{_pallas_forward.1} parent=1 // pred_fallthru
      _
    // Predicated region
    $region10: #{_pallas_forward.1} parent=1 // pred_check
      _
    $region11: #{_pallas_forward.1} parent=1 // pred_check_branch
      %35 = sbr.rel (0) target = $region13
    $region12: #{_pallas_forward.1} parent=1 // pred_region
      _
    $region13: #{_pallas_forward.1} parent=1 // pred_fallthru
      _
    // Predicated region
    $region14: #{_pallas_forward.1} parent=1 // pred_check
      _
    $region15: #{_pallas_forward.1} parent=1 // pred_check_branch
      %37 = sbr.rel (0) target = $region17
    $region16: #{_pallas_forward.1} parent=1 // pred_region
      %s39 = ssub.s32 1024, 1024
      %40 = vsyncadd [#allocation5], %s39
      %s41 = sshll.u32 [#allocation6], 4
      %s42 = int_to_ptr.vmem [resolvable:$true] %s41
      %47 = dma.hbm_to_vmem [thread:$0]  %s3, 1024, %s42, [#allocation5], 64, 64, 4
    $region17: #{_pallas_forward.1} parent=1 // pred_fallthru
      _
    // Predicated region
    $region18: #{_pallas_forward.1} parent=1 // pred_check
      _
    $region19: #{_pallas_forward.1} parent=1 // pred_check_branch
      %49 = sbr.rel (0) target = $region21
    $region20: #{_pallas_forward.1} parent=1 // pred_region
      _
    $region21: #{_pallas_forward.1} parent=1 // pred_fallthru
      _
    // Predicated region
    $region22: #{_pallas_forward.1} parent=1 // pred_check
      _
    $region23: #{_pallas_forward.1} parent=1 // pred_check_branch
      %51 = sbr.rel (0) target = $region25
    $region24: #{_pallas_forward.1} parent=1 // pred_region
      %52 = dma.done [#allocation3], 128
    $region25: #{_pallas_forward.1} parent=1 // pred_fallthru
      _
    // Predicated region
    $region26: #{_pallas_forward.1} parent=1 // pred_check
      _
    $region27: #{_pallas_forward.1} parent=1 // pred_check_branch
      %54 = sbr.rel (0) target = $region29
    $region28: #{_pallas_forward.1} parent=1 // pred_region
      %55 = dma.done [#allocation5], 128
    $region29: #{_pallas_forward.1} parent=1 // pred_fallthru
      _
    // Predicated region
    $region30: #{_pallas_forward.1} parent=1 // pred_check
      _
    $region31: #{_pallas_forward.1} parent=1 // pred_check_branch
      %57 = sbr.rel (0) target = $region33
    $region32: #{_pallas_forward.1} parent=1 // pred_region
      %58 = dma.done [#allocation5], 1024
    $region33: #{_pallas_forward.1} parent=1 // pred_fallthru
      _
    %v60 = vld [vmem:[#allocation2] sm:$0xff]
    %v61 = vpack.c.bf16 %v60, %v60
    %v62 = vld [vmem:[#allocation4] sm:$0xf]
    %v63 = vld [vmem:[#allocation4 + $0x4] sm:$0x3]
    %v64 = vld [vmem:[%s2] sm:$0x1]
    %v66 = vlaneseq
    %v67 = vshrl.u32 %v66, 7
    %v68 = vsub.s32 0, %v67
    %v69 = vrot.slane %v64, %v68
    %v73 = vunpack.c.l.b16 %v62
    %v74 = vunpack.c.l.b16 %v63
    %v75 = vpack.c.b16 %v74, %v73
    %vm76 = vcmask 89088
    %v78 = vsel %vm76, %v61, 0
    %vm80 = vcmask 1044480
    %vm81 = vcmask 1045504
    %v82 = vsel %vm80, 4294967295, 65535
    %v83 = vsel %vm81, %v82, 0
    %v85 = vand.u32 %v75, %v83
    %87 = vmatprep.subr.bf16.mxu0 0
    %88 = vmatpush1.bf16.msra.mxu0 %v85
    %89 = vmatprep.subr.bf16.mxu0 0
    %90 = vmatpush1.bf16.msra.mxu0 0
    %91 = vmatprep.subr.bf16.mxu0 0
    %92 = vmatpush1.bf16.msra.mxu0 0
    %93 = vmatprep.subr.bf16.mxu0 0
    %94 = vmatpush1.bf16.msra.mxu0 0
    %95 = vmatprep.subr.bf16.mxu0 0
    %96 = vmatpush1.bf16.msra.mxu0 0
    %97 = vmatprep.subr.bf16.mxu0 0
    %98 = vmatpush1.bf16.msra.mxu0 0
    %99 = vmatprep.subr.bf16.mxu0 0
    %100 = vmatpush1.bf16.msra.mxu0 0
    %101 = vmatprep.subr.bf16.mxu0 0
    %102 = vmatpush1.bf16.msra.mxu0 0
    %103 = vmatprep.subr.bf16.mxu0 0
    %104 = vmatpush1.bf16.msra.mxu0 0
    %105 = vmatprep.subr.bf16.mxu0 0
    %106 = vmatpush1.bf16.msra.mxu0 0
    %107 = vmatprep.subr.bf16.mxu0 0
    %108 = vmatpush1.bf16.msra.mxu0 0
    %109 = vmatprep.subr.bf16.mxu0 0
    %110 = vmatpush1.bf16.msra.mxu0 0
    %111 = vmatprep.subr.bf16.mxu0 0
    %112 = vmatpush1.bf16.msra.mxu0 0
    %113 = vmatprep.subr.bf16.mxu0 0
    %114 = vmatpush1.bf16.msra.mxu0 0
    %115 = vmatprep.subr.bf16.mxu0 0
    %116 = vmatpush1.bf16.msra.mxu0 0
    %117 = vmatprep.subr.bf16.mxu0 0
    %118 = vmatpush1.bf16.msra.mxu0 0
    %119 = vmatprep.mubr.bf16.mxu0 0
    %120 = vmatmul.mubr.bf16.gmra.mrb[0].mxu0 %v78
    %v121 = vpop.f32.mrb[0].mxu0
    %v122 = vadd.f32 %v69, %v121
    %v123 = vpop.f32.mrb[0].mxu0
    %v124 = vpop.f32.mrb[0].mxu0
    %v125 = vpop.f32.mrb[0].mxu0
    %126 = vdwg.mxu0
    %v127 = vmax.f32 %v122, 0.0
    %v128 = vpack.c.bf16 %v127, %v127
    %v129 = vld [vmem:[#allocation6] sm:$0xf]
    %v130 = vld [vmem:[#allocation6 + $0x4] sm:$0xf]
    %v131 = vld [vmem:[#allocation6 + $0x8] sm:$0xf]
    %v132 = vld [vmem:[#allocation6 + $0xc] sm:$0xf]
    %v133 = vld [vmem:[#allocation6 + $0x10] sm:$0xf]
    %v134 = vld [vmem:[#allocation6 + $0x14] sm:$0xf]
    %v135 = vld [vmem:[#allocation6 + $0x18] sm:$0xf]
    %v136 = vld [vmem:[#allocation6 + $0x1c] sm:$0xf]
    %v137 = vld [vmem:[#allocation6 + $0x20] sm:$0xf]
    %v138 = vld [vmem:[#allocation6 + $0x24] sm:$0xf]
    %v139 = vld [vmem:[#allocation6 + $0x28] sm:$0xf]
    %v140 = vld [vmem:[#allocation6 + $0x2c] sm:$0xf]
    %v141 = vld [vmem:[#allocation6 + $0x30] sm:$0xf]
    %v142 = vld [vmem:[#allocation6 + $0x34] sm:$0xf]
    %v143 = vld [vmem:[#allocation6 + $0x38] sm:$0xf]
    %v144 = vld [vmem:[#allocation6 + $0x3c] sm:$0xf]
    %v145 = vld [vmem:[%s4] sm:$0x1]
    %v147 = vlaneseq
    %v148 = vshrl.u32 %v147, 7
    %v149 = vsub.s32 0, %v148
    %v150 = vrot.slane %v145, %v149
    %v168 = vunpack.c.l.b16 %v129
    %v169 = vunpack.c.l.b16 %v130
    %v170 = vunpack.c.l.b16 %v131
    %v171 = vunpack.c.l.b16 %v132
    %v172 = vunpack.c.l.b16 %v133
    %v173 = vunpack.c.l.b16 %v134
    %v174 = vunpack.c.l.b16 %v135
    %v175 = vunpack.c.l.b16 %v136
    %v176 = vunpack.c.l.b16 %v137
    %v177 = vunpack.c.l.b16 %v138
    %v178 = vunpack.c.l.b16 %v139
    %v179 = vunpack.c.l.b16 %v140
    %v180 = vunpack.c.l.b16 %v141
    %v181 = vunpack.c.l.b16 %v142
    %v182 = vunpack.c.l.b16 %v143
    %v183 = vunpack.c.l.b16 %v144
    %v184 = vpack.c.b16 %v169, %v168
    %v185 = vpack.c.b16 %v171, %v170
    %v186 = vpack.c.b16 %v173, %v172
    %v187 = vpack.c.b16 %v175, %v174
    %v188 = vpack.c.b16 %v177, %v176
    %v189 = vpack.c.b16 %v179, %v178
    %v190 = vpack.c.b16 %v181, %v180
    %v191 = vpack.c.b16 %v183, %v182
    %200 = vmatprep.subr.bf16.mxu0 0
    %201 = vmatpush1.bf16.msra.mxu0 %v184
    %202 = vmatprep.subr.bf16.mxu0 0
    %203 = vmatpush1.bf16.msra.mxu0 %v185
    %204 = vmatprep.subr.bf16.mxu0 0
    %205 = vmatpush1.bf16.msra.mxu0 %v186
    %206 = vmatprep.subr.bf16.mxu0 0
    %207 = vmatpush1.bf16.msra.mxu0 %v187
    %208 = vmatprep.subr.bf16.mxu0 0
    %209 = vmatpush1.bf16.msra.mxu0 %v188
    %210 = vmatprep.subr.bf16.mxu0 0
    %211 = vmatpush1.bf16.msra.mxu0 %v189
    %212 = vmatprep.subr.bf16.mxu0 0
    %213 = vmatpush1.bf16.msra.mxu0 %v190
    %214 = vmatprep.subr.bf16.mxu0 0
    %215 = vmatpush1.bf16.msra.mxu0 %v191
    %216 = vmatprep.subr.bf16.mxu0 0
    %217 = vmatpush1.bf16.msra.mxu0 0
    %218 = vmatprep.subr.bf16.mxu0 0
    %219 = vmatpush1.bf16.msra.mxu0 0
    %220 = vmatprep.subr.bf16.mxu0 0
    %221 = vmatpush1.bf16.msra.mxu0 0
    %222 = vmatprep.subr.bf16.mxu0 0
    %223 = vmatpush1.bf16.msra.mxu0 0
    %224 = vmatprep.subr.bf16.mxu0 0
    %225 = vmatpush1.bf16.msra.mxu0 0
    %226 = vmatprep.subr.bf16.mxu0 0
    %227 = vmatpush1.bf16.msra.mxu0 0
    %228 = vmatprep.subr.bf16.mxu0 0
    %229 = vmatpush1.bf16.msra.mxu0 0
    %230 = vmatprep.subr.bf16.mxu0 0
    %231 = vmatpush1.bf16.msra.mxu0 0
    %232 = vmatprep.mubr.bf16.mxu0 0
    %233 = vmatmul.mubr.bf16.gmra.mrb[0].mxu0 %v128
    %v234 = vpop.f32.mrb[0].mxu0
    %v235 = vadd.f32 %v150, %v234
    %v236 = vpop.f32.mrb[0].mxu0
    %v237 = vpop.f32.mrb[0].mxu0
    %v238 = vpop.f32.mrb[0].mxu0
    %239 = vdwg.mxu0
    %v240 = vpack.c.bf16 %v235, %v235
    %241 = vst [vmem:[%s5] sm:$0xf] %v240
    // Predicated region
    $region34: #{_pallas_forward.1} parent=1 // pred_check
      _
    $region35: #{_pallas_forward.1} parent=1 // pred_check_branch
      %243 = sbr.rel (0) target = $region37
    $region36: #{_pallas_forward.1} parent=1 // pred_region
      _
    $region37: #{_pallas_forward.1} parent=1 // pred_fallthru
      _
    // Predicated region
    $region38: #{_pallas_forward.1} parent=1 // pred_check
      _
    $region39: #{_pallas_forward.1} parent=1 // pred_check_branch
      %245 = sbr.rel (0) target = $region41
    $region40: #{_pallas_forward.1} parent=1 // pred_region
      _
    $region41: #{_pallas_forward.1} parent=1 // pred_fallthru
      _
    %246 = vsyncpa [#allocation3], 1
    %247 = vsyncpa [#allocation5], 1

</llo_original>
